<compile_context>
chip_gen: v6e
topology: v6e:2x2x1
jax: 0.10.0
libtpu: 0.0.40
codegen_flags: <defaults>
</compile_context>

<pallas_src>
import functools

import jax
import jax.numpy as jnp
from jax.experimental import pallas as pl
from jax.experimental.pallas import tpu as pltpu

_KS = 7          # conv kernel size
_PAD = 3         # (kernel_size - 1) // 2
_TARGET_BLOCK_BYTES = 2 << 20   # ~2 MiB per streamed x block: >=85% of the
                                # HBM roofline on v5e/v6e and comfortably
                                # inside v7x's 64 MiB VMEM with double
                                # buffering across both mem-bound passes.


# --------------------------------------------------------------------------- #
# tiling helpers
# --------------------------------------------------------------------------- #
def _vmem_limit_bytes():
    """Scoped-VMEM cap: ~3/4 of physical (96 MiB on v5e/v6e, 48 MiB on v7x)."""
    try:
        cap = int(pltpu.get_tpu_info().vmem_capacity_bytes)
    except Exception:  # older jax / interpreter: conservative fallback
        cap = 64 << 20
    return max(32 << 20, min((cap * 3) // 4, 96 << 20))


def _largest_lane_divisor(L, max_elems):
    """Largest divisor of L that is a multiple of 128 and <= max_elems.

    Falls back to L itself when L is not lane-aligned or already fits.
    """
    if L <= max_elems or L % 128 != 0:
        return L
    q = L // 128
    best = 1
    d = 1
    while d * d <= q:
        if q % d == 0:
            for cand in (d, q // d):
                if cand * 128 <= max_elems and cand > best:
                    best = cand
        d += 1
    return best * 128


def _tile_cl(C, L, itemsize, target_bytes=_TARGET_BLOCK_BYTES):
    """Dtype-/size-aware (cblk, lblk).

    lblk is lane-dense (multiple of 128 dividing L); cblk is a multiple of the
    packed-sublane count (8 f32 / 16 bf16 / 32 int8) grown until each streamed
    x block is ~target_bytes.
    """
    pack = max(1, 32 // itemsize)
    lane_cap = max(128, target_bytes // (pack * itemsize))
    lblk = _largest_lane_divisor(L, lane_cap)
    if C % pack != 0:
        # Odd channel counts: keep full C but bound the lane tile instead.
        lblk = _largest_lane_divisor(
            L, max(128, (4 * target_bytes) // max(1, C * itemsize)))
        return C, lblk
    if C * lblk * itemsize <= target_bytes:
        return C, lblk
    cblk = pack
    while C % (cblk * 2) == 0 and (cblk * 2) * lblk * itemsize <= target_bytes:
        cblk *= 2
    return cblk, lblk


# --------------------------------------------------------------------------- #
# pass 1: ZPool (channel max + mean); C streamed as the innermost reduction
# --------------------------------------------------------------------------- #
def _zpool_kernel(x_ref, comp_ref, *, inv_c):
    """Grid (N, L//lblk, C//cblk); the C axis (innermost) is a reduction.

    x_ref    : (1, cblk, lblk)  input block (native dtype)
    comp_ref : (1, 2, lblk) f32 output block, resident across the C axis.
               row 0 = running channel max, row 1 = running channel sum
               (converted to the mean at the last reduction step).
    """
    c = pl.program_id(2)
    xb = x_ref[0].astype(jnp.float32)                   # (cblk, lblk)
    bmax = jnp.max(xb, axis=0, keepdims=True)           # (1, lblk)
    bsum = jnp.sum(xb, axis=0, keepdims=True)           # (1, lblk)

    @pl.when(c == 0)
    def _():
        comp_ref[0, 0:1, :] = bmax
        comp_ref[0, 1:2, :] = bsum

    @pl.when(c > 0)
    def _():
        comp_ref[0, 0:1, :] = jnp.maximum(comp_ref[0, 0:1, :], bmax)
        comp_ref[0, 1:2, :] = comp_ref[0, 1:2, :] + bsum

    @pl.when(c == pl.num_programs(2) - 1)
    def _():
        comp_ref[0, 1:2, :] = comp_ref[0, 1:2, :] * inv_c


# --------------------------------------------------------------------------- #
# pass 2: Conv3d(2->1, k=7, pad=3) via banded MXU matmuls + folded BN + sigmoid
# --------------------------------------------------------------------------- #
def _conv_gate_kernel(comp_ref, b_ref, shift_ref, scale_ref, pad_ref, *, D, H, W):
    """Grid (N,): one batch element's compressed volume per step.

    comp_ref  : (1, 2, D, H, W) f32       ZPool output (max, mean)
    b_ref     : (49, 2*Wp, W) f32 VMEM    banded conv weights (BN scale folded)
    shift_ref : (1,) f32 SMEM             folded BatchNorm shift
    scale_ref : (1, D, H, W) bf16         sigmoid(BN(conv(.)))
    pad_ref   : (D+6, H+6, 2*Wp) f32 VMEM zero-padded conv input scratch;
                channel c occupies lane columns [c*Wp, (c+1)*Wp).
    """
    Wp = W + 2 * _PAD
    Hp = H + 2 * _PAD

    # ---- zero only the halo slabs; the interior is overwritten below.
    # (No program_id guard: scratch is per-TensorCore on megacore parts.)
    pad_ref[0:_PAD] = jnp.zeros((_PAD, Hp, 2 * Wp), jnp.float32)
    pad_ref[_PAD + D:] = jnp.zeros((_PAD, Hp, 2 * Wp), jnp.float32)
    pad_ref[_PAD:_PAD + D, 0:_PAD, :] = jnp.zeros((D, _PAD, 2 * Wp), jnp.float32)
    pad_ref[_PAD:_PAD + D, _PAD + H:, :] = jnp.zeros((D, _PAD, 2 * Wp), jnp.float32)
    pad_ref[_PAD:_PAD + D, _PAD:_PAD + H, 0:_PAD] = (
        jnp.zeros((D, H, _PAD), jnp.float32))
    pad_ref[_PAD:_PAD + D, _PAD:_PAD + H, _PAD + W:Wp + _PAD] = (
        jnp.zeros((D, H, 2 * _PAD), jnp.float32))
    pad_ref[_PAD:_PAD + D, _PAD:_PAD + H, Wp + _PAD + W:] = (
        jnp.zeros((D, H, _PAD), jnp.float32))

    # ---- interior: the two compressed channels side-by-side along lanes ----
    pad_ref[_PAD:_PAD + D, _PAD:_PAD + H, _PAD:_PAD + W] = comp_ref[0, 0]
    pad_ref[_PAD:_PAD + D, _PAD:_PAD + H, Wp + _PAD:Wp + _PAD + W] = comp_ref[0, 1]

    shift = shift_ref[0]

    # ---- 49 banded MXU matmuls, D folded into the matmul M dimension.
    #      4 independent accumulators keep the VALU add chain short.
    accs = [jnp.zeros((D * H, W), jnp.float32) for _ in range(4)]
    t = 0
    for kd in range(_KS):
        for kh in range(_KS):
            lhs = pad_ref[kd:kd + D, kh:kh + H, :].reshape(D * H, 2 * Wp)
            accs[t % 4] = accs[t % 4] + jnp.dot(
                lhs, b_ref[kd * _KS + kh],
                preferred_element_type=jnp.float32)
            t += 1
    y = (accs[0] + accs[1]) + (accs[2] + accs[3]) + shift
    scale_ref[0] = jax.nn.sigmoid(y).reshape(D, H, W).astype(scale_ref.dtype)


# --------------------------------------------------------------------------- #
# pass 3: lane-dense elementwise gate in x's native dtype
# --------------------------------------------------------------------------- #
def _gate_kernel(x_ref, s_ref, o_ref):
    x = x_ref[...]                                      # (1, cblk, lblk)
    s = s_ref[...].astype(x.dtype)                      # (1, 1, lblk)
    # Native-dtype multiply (bf16 stays bf16 on v6e/v7x; f32 stays f32).
    o_ref[...] = (x * s).astype(o_ref.dtype)


# --------------------------------------------------------------------------- #
# wrapper
# --------------------------------------------------------------------------- #
def attention_gate(x, conv_w, bn_gamma, bn_beta, bn_mean, bn_var, eps=1e-5):
    """x: (N, C, D, H, W); conv_w: (1, 2, 7, 7, 7)."""
    N, C, D, H, W = x.shape
    assert conv_w.shape == (1, 2, _KS, _KS, _KS)
    L = D * H * W
    Wp = W + 2 * _PAD
    itemsize = x.dtype.itemsize

    # ---- fold BatchNorm3d (eval mode) into the conv weights + scalar shift --
    gamma = jnp.asarray(bn_gamma, jnp.float32).reshape(())
    beta = jnp.asarray(bn_beta, jnp.float32).reshape(())
    mean = jnp.asarray(bn_mean, jnp.float32).reshape(())
    var = jnp.asarray(bn_var, jnp.float32).reshape(())
    bn_scale = gamma * jax.lax.rsqrt(var + eps)
    bn_shift = (beta - mean * bn_scale).reshape(1)

    # ---- banded conv-weight matrices: one (2*Wp, W) matrix per (kd, kh) tap,
    #      jointly contracting the 2 input channels and the 7 kw taps on MXU.
    w = conv_w.reshape(2, _KS, _KS, _KS).astype(jnp.float32)     # (c, kd, kh, kw)
    win = jnp.arange(Wp)[:, None]
    wout = jnp.arange(W)[None, :]
    kw_idx = win - wout                                          # (Wp, W)
    valid = (kw_idx >= 0) & (kw_idx < _KS)
    taps = jnp.where(valid[None, None, None],
                     w[:, :, :, jnp.clip(kw_idx, 0, _KS - 1)],
                     0.0)                                        # (2, 7, 7, Wp, W)
    bmat = jnp.transpose(taps, (1, 2, 0, 3, 4)).reshape(_KS * _KS, 2 * Wp, W)
    bmat = (bmat * bn_scale).astype(jnp.float32)

    vmem_limit = _vmem_limit_bytes()
    cparams = lambda sem: pltpu.CompilerParams(
        dimension_semantics=sem, vmem_limit_bytes=vmem_limit)

    # Shared dtype-/size-aware (C, L) tiling for the two mem-bound passes.
    cblk, lblk = _tile_cl(C, L, itemsize)
    xf = x.reshape(N, C, L)

    # ---- pass 1: ZPool; C innermost reduction, resident (1, 2, lblk) out ----
    comp = pl.pallas_call(
        functools.partial(_zpool_kernel, inv_c=1.0 / C),
        out_shape=jax.ShapeDtypeStruct((N, 2, L), jnp.float32),
        grid=(N, L // lblk, C // cblk),
        in_specs=[pl.BlockSpec((1, cblk, lblk), lambda n, l, c: (n, c, l))],
        out_specs=pl.BlockSpec((1, 2, lblk), lambda n, l, c: (n, 0, l)),
        compiler_params=cparams(("parallel", "parallel", "arbitrary")),
    )(xf)

    # ---- pass 2: conv (MXU) + folded BN + sigmoid on the 2-channel volume ---
    comp5 = comp.reshape(N, 2, D, H, W)                 # free metadata reshape
    scale = pl.pallas_call(
        functools.partial(_conv_gate_kernel, D=D, H=H, W=W),
        out_shape=jax.ShapeDtypeStruct((N, D, H, W), jnp.bfloat16),
        grid=(N,),
        in_specs=[
            pl.BlockSpec((1, 2, D, H, W), lambda n: (n, 0, 0, 0, 0)),
            pl.BlockSpec((_KS * _KS, 2 * Wp, W), lambda n: (0, 0, 0)),
            pl.BlockSpec(memory_space=pltpu.MemorySpace.SMEM),
        ],
        out_specs=pl.BlockSpec((1, D, H, W), lambda n: (n, 0, 0, 0)),
        scratch_shapes=[
            pltpu.VMEM((D + 2 * _PAD, H + 2 * _PAD, 2 * Wp), jnp.float32)],
        compiler_params=cparams(("parallel",)),
    )(comp5, bmat, bn_shift)

    # ---- pass 3: elementwise gate; C innermost so the scale block (index
    #      (n, 0, l)) is fetched once per (n, l) and reused across C tiles ----
    sflat = scale.reshape(N, 1, L)                      # bf16, free reshape
    out = pl.pallas_call(
        _gate_kernel,
        out_shape=jax.ShapeDtypeStruct((N, C, L), x.dtype),
        grid=(N, L // lblk, C // cblk),
        in_specs=[
            pl.BlockSpec((1, cblk, lblk), lambda n, l, c: (n, c, l)),
            pl.BlockSpec((1, 1, lblk), lambda n, l, c: (n, 0, l)),
        ],
        out_specs=pl.BlockSpec((1, cblk, lblk), lambda n, l, c: (n, c, l)),
        compiler_params=cparams(("parallel", "parallel", "arbitrary")),
    )(xf, sflat)

    return out.reshape(N, C, D, H, W)


def attention_gate_reference(x, conv_w, bn_gamma, bn_beta, bn_mean, bn_var, eps=1e-5):
    """Pure-JAX reference (same eval-mode BN semantics, full precision)."""
    cmax = jnp.max(x, axis=1, keepdims=True)
    cmean = jnp.mean(x, axis=1, keepdims=True)
    comp = jnp.concatenate([cmax, cmean], axis=1)                 # (N, 2, D, H, W)
    y = jax.lax.conv_general_dilated(
        comp, conv_w,
        window_strides=(1, 1, 1),
        padding=[(_PAD, _PAD)] * 3,
        dimension_numbers=("NCDHW", "OIDHW", "NCDHW"),
        precision=jax.lax.Precision.HIGHEST,
    )                                                             # (N, 1, D, H, W)
    s = bn_gamma / jnp.sqrt(bn_var + eps)
    b = bn_beta - bn_mean * s
    y = y * s + b
    return x * jax.nn.sigmoid(y)


if __name__ == "__main__":
    key = jax.random.PRNGKey(0)
    kx, kw_ = jax.random.split(key)

    # Small NCDHW shapes: batch=2, channels=16, depth=4, height=8, width=16.
    # L = D*H*W = 512 (lane-dense); C=16 exercises the C-tiling logic.
    N, C, D, H, W = 2, 16, 4, 8, 16
    x = jax.random.normal(kx, (N, C, D, H, W), dtype=jnp.float32)

    # Deterministic synthetic parameters (Conv3d(2,1,7) weight + BN(1) stats),
    # BN params deliberately shaped (1,) like nn.BatchNorm3d(1) parameters.
    conv_w = 0.05 * jax.random.normal(kw_, (1, 2, _KS, _KS, _KS), dtype=jnp.float32)
    bn_gamma = jnp.array([1.2], jnp.float32)
    bn_beta = jnp.array([0.1], jnp.float32)
    bn_mean = jnp.array([0.05], jnp.float32)
    bn_var = jnp.array([0.8], jnp.float32)

    out = jax.block_until_ready(
        attention_gate(x, conv_w, bn_gamma, bn_beta, bn_mean, bn_var))
    ref = jax.block_until_ready(
        attention_gate_reference(x, conv_w, bn_gamma, bn_beta, bn_mean, bn_var))

    assert out.shape == x.shape and out.dtype == x.dtype
    # Tolerance accommodates (a) the MXU's reduced-precision f32 conv passes
    # and (b) the bf16 storage of the sigmoid gate (rel err ~2e-3 on [0,1]);
    # structural/indexing bugs would produce errors far above this.
    err = float(jnp.max(jnp.abs(out - ref)))
    assert err < 3e-2, err
    print("KERNEL_OK")
</pallas_src>

<mosaic_0001>
module attributes {stable_mosaic.version = 11 : i64} {
  func.func @_zpool_kernel(%arg0: i32, %arg1: i32, %arg2: i32, %arg3: memref<1x16x512xf32, #tpu.memory_space<vmem>>, %arg4: memref<1x2x512xf32, #tpu.memory_space<vmem>>) attributes {dimension_semantics = [#tpu.dimension_semantics<parallel>, #tpu.dimension_semantics<parallel>, #tpu.dimension_semantics<arbitrary>], iteration_bounds = array<i64: 2, 1, 1>, scalar_prefetch = 0 : i64, scratch_operands = 0 : i64, tpu.core_type = #tpu.core_type<tc>, window_params = [{transform_indices = @transform_0, window_bounds = array<i64: 1, 16, 512>}, {transform_indices = @transform_1, window_bounds = array<i64: 1, 2, 512>}]} {
    %c0 = arith.constant 0 : index
    %c0_0 = arith.constant 0 : index
    %c0_1 = arith.constant 0 : index
    %0 = vector.load %arg3[%c0, %c0_0, %c0_1] : memref<1x16x512xf32, #tpu.memory_space<vmem>>, vector<1x16x512xf32>
    %1 = vector.shape_cast %0 : vector<1x16x512xf32> to vector<16x512xf32>
    %cst = arith.constant dense<0xFF800000> : vector<512xf32>
    %2 = vector.multi_reduction <maximumf>, %1, %cst [0] : vector<16x512xf32> to vector<512xf32>
    %3 = vector.shape_cast %2 : vector<512xf32> to vector<1x512xf32>
    %cst_2 = arith.constant dense<0.000000e+00> : vector<512xf32>
    %4 = vector.multi_reduction <add>, %1, %cst_2 [0] : vector<16x512xf32> to vector<512xf32>
    %5 = vector.shape_cast %4 : vector<512xf32> to vector<1x512xf32>
    %c0_i32 = arith.constant 0 : i32
    %6 = arith.cmpi eq, %arg2, %c0_i32 : i32
    %7 = arith.extui %6 : i1 to i32
    %c0_i32_3 = arith.constant 0 : i32
    %8 = arith.cmpi ne, %7, %c0_i32_3 : i32
    scf.if %8 {
      %c0_8 = arith.constant 0 : index
      %c0_9 = arith.constant 0 : index
      %c0_10 = arith.constant 0 : index
      %15 = vector.load %arg4[%c0_8, %c0_9, %c0_10] : memref<1x2x512xf32, #tpu.memory_space<vmem>>, vector<1x1x512xf32>
      %16 = vector.shape_cast %15 : vector<1x1x512xf32> to vector<1x512xf32>
      %17 = vector.shape_cast %3 : vector<1x512xf32> to vector<1x1x512xf32>
      tpu.vector_store %arg4[%c0_8, %c0_9, %c0_10], %17 {strides = array<i32>} : memref<1x2x512xf32, #tpu.memory_space<vmem>>, vector<1x1x512xf32>,
      %c0_11 = arith.constant 0 : index
      %c1 = arith.constant 1 : index
      %c0_12 = arith.constant 0 : index
      %18 = vector.load %arg4[%c0_11, %c1, %c0_12] : memref<1x2x512xf32, #tpu.memory_space<vmem>>, vector<1x1x512xf32>
      %19 = vector.shape_cast %18 : vector<1x1x512xf32> to vector<1x512xf32>
      %20 = vector.shape_cast %5 : vector<1x512xf32> to vector<1x1x512xf32>
      tpu.vector_store %arg4[%c0_11, %c1, %c0_12], %20 {strides = array<i32>} : memref<1x2x512xf32, #tpu.memory_space<vmem>>, vector<1x1x512xf32>,
    } else {
    }
    %c0_i32_4 = arith.constant 0 : i32
    %9 = arith.cmpi sgt, %arg2, %c0_i32_4 : i32
    %10 = arith.extui %9 : i1 to i32
    %c0_i32_5 = arith.constant 0 : i32
    %11 = arith.cmpi ne, %10, %c0_i32_5 : i32
    scf.if %11 {
      %c0_8 = arith.constant 0 : index
      %c0_9 = arith.constant 0 : index
      %c0_10 = arith.constant 0 : index
      %15 = vector.load %arg4[%c0_8, %c0_9, %c0_10] : memref<1x2x512xf32, #tpu.memory_space<vmem>>, vector<1x1x512xf32>
      %16 = vector.shape_cast %15 : vector<1x1x512xf32> to vector<1x512xf32>
      %17 = arith.maximumf %16, %3 : vector<1x512xf32>
      %c0_11 = arith.constant 0 : index
      %c0_12 = arith.constant 0 : index
      %c0_13 = arith.constant 0 : index
      %18 = vector.load %arg4[%c0_11, %c0_12, %c0_13] : memref<1x2x512xf32, #tpu.memory_space<vmem>>, vector<1x1x512xf32>
      %19 = vector.shape_cast %18 : vector<1x1x512xf32> to vector<1x512xf32>
      %20 = vector.shape_cast %17 : vector<1x512xf32> to vector<1x1x512xf32>
      tpu.vector_store %arg4[%c0_11, %c0_12, %c0_13], %20 {strides = array<i32>} : memref<1x2x512xf32, #tpu.memory_space<vmem>>, vector<1x1x512xf32>,
      %c0_14 = arith.constant 0 : index
      %c1 = arith.constant 1 : index
      %c0_15 = arith.constant 0 : index
      %21 = vector.load %arg4[%c0_14, %c1, %c0_15] : memref<1x2x512xf32, #tpu.memory_space<vmem>>, vector<1x1x512xf32>
      %22 = vector.shape_cast %21 : vector<1x1x512xf32> to vector<1x512xf32>
      %23 = arith.addf %22, %5 : vector<1x512xf32>
      %c0_16 = arith.constant 0 : index
      %c1_17 = arith.constant 1 : index
      %c0_18 = arith.constant 0 : index
      %24 = vector.load %arg4[%c0_16, %c1_17, %c0_18] : memref<1x2x512xf32, #tpu.memory_space<vmem>>, vector<1x1x512xf32>
      %25 = vector.shape_cast %24 : vector<1x1x512xf32> to vector<1x512xf32>
      %26 = vector.shape_cast %23 : vector<1x512xf32> to vector<1x1x512xf32>
      tpu.vector_store %arg4[%c0_16, %c1_17, %c0_18], %26 {strides = array<i32>} : memref<1x2x512xf32, #tpu.memory_space<vmem>>, vector<1x1x512xf32>,
    } else {
    }
    %c0_i32_6 = arith.constant 0 : i32
    %12 = arith.cmpi eq, %arg2, %c0_i32_6 : i32
    %13 = arith.extui %12 : i1 to i32
    %c0_i32_7 = arith.constant 0 : i32
    %14 = arith.cmpi ne, %13, %c0_i32_7 : i32
    scf.if %14 {
      %c0_8 = arith.constant 0 : index
      %c1 = arith.constant 1 : index
      %c0_9 = arith.constant 0 : index
      %15 = vector.load %arg4[%c0_8, %c1, %c0_9] : memref<1x2x512xf32, #tpu.memory_space<vmem>>, vector<1x1x512xf32>
      %16 = vector.shape_cast %15 : vector<1x1x512xf32> to vector<1x512xf32>
      %cst_10 = arith.constant 6.250000e-02 : f32
      %17 = vector.broadcast %cst_10 : f32 to vector<1x512xf32>
      %18 = arith.mulf %16, %17 : vector<1x512xf32>
      %c0_11 = arith.constant 0 : index
      %c1_12 = arith.constant 1 : index
      %c0_13 = arith.constant 0 : index
      %19 = vector.load %arg4[%c0_11, %c1_12, %c0_13] : memref<1x2x512xf32, #tpu.memory_space<vmem>>, vector<1x1x512xf32>
      %20 = vector.shape_cast %19 : vector<1x1x512xf32> to vector<1x512xf32>
      %21 = vector.shape_cast %18 : vector<1x512xf32> to vector<1x1x512xf32>
      tpu.vector_store %arg4[%c0_11, %c1_12, %c0_13], %21 {strides = array<i32>} : memref<1x2x512xf32, #tpu.memory_space<vmem>>, vector<1x1x512xf32>,
    } else {
    }
    return
  }
  func.func @transform_0(%arg0: i32, %arg1: i32, %arg2: i32) -> (i32, i32, i32) {
    %c0_i32 = arith.constant 0 : i32
    return %arg0, %arg2, %arg1 : i32, i32, i32
  }
  func.func @transform_1(%arg0: i32, %arg1: i32, %arg2: i32) -> (i32, i32, i32) {
    %c0_i32 = arith.constant 0 : i32
    %c0_i32_0 = arith.constant 0 : i32
    return %arg0, %c0_i32, %arg1 : i32, i32, i32
  }
}

</mosaic_0001>

<llo_original>
// kernel: tpu_custom_call.1
$region0: #{tpu_custom_call.1}
  #allocation0 [shape = 'u32[]', space=smem, size = 0x4, offset = 0x4, fixed_abs, tag = 'smem constant byte address 0x4 - core index']
  #allocation1 [shape = 'u32[144,128]{1,0:T(1,128)}', space=vmem, size = 0x12000, scoped, tag = 'internal scratch']
  %s0 = inlined_call_operand.hbm [shape: f32[2,16,512], index: 0, kind: input, shape index: {}]
  %s1 = inlined_call_operand.hbm [shape: f32[2,2,512], index: 1, kind: output, shape index: {}]
  %s2 = sld [smem:[#allocation0]]
  $region53: #{tpu_custom_call.1} parent=0
    _
  %s4 = ssub.s32 1, %s2
  %s5 = scalar_select 0, %s4, %s2
  $region1: #{tpu_custom_call.1} parent=0
    #allocation2 [shape = 'u8[65536]{0}', space=vmem, size = 0x10000, scoped, tag = 'input window, operand 0']
    #allocation3 [shape = 's32[2]{0}', space=sflag, size = 0x8, scoped, tag = 'scoped memory for tpu_custom_call.1']
    #allocation4 [shape = 's32[2]{0}', space=sflag, size = 0x8, scoped, tag = 'scoped memory for tpu_custom_call.1']
    #allocation5 [shape = 'u8[8192]{0}', space=vmem, size = 0x2000, scoped, tag = 'output window, operand 0']
    %6 = vsyncpa [#allocation3], 0
    %s7 = scalar_lea.sflag [#allocation3], 1
    %8 = vsyncpa %s7, 0
    %9 = vsyncpa [#allocation4], 0
    %s10 = scalar_lea.sflag [#allocation4], 1
    %11 = vsyncpa %s10, 0
    loop: start=0, step=1, limit=4
    $region2: #{tpu_custom_call.1} parent=1 // loop_pre_header
      _
    $region3: #{tpu_custom_call.1} parent=1 // loop_header
      %s13 = sphi 0, %s17
      %p14 = scmp.ge.s32.totalorder %s13, 4
      %s20 = sphi 0, %s39
      %s21 = sphi 0, %s35
      %s22 = sphi 0, %s31
      %s23 = sphi 0, %s20
      %s24 = sphi 0, %s21
      %s25 = sphi 0, %s22
      %s26 = sphi 0, %s23
      %s27 = sphi 0, %s24
      %s28 = sphi 0, %s25
      %s46 = sphi 0, %s48
      %s49 = sphi 0, %s46
      %s50 = sphi 0, %s49
      %s66 = sphi 0, %s50
      %s74 = sphi 0, %s76
      %s77 = sphi 0, %s74
      %s78 = sphi 0, %s77
      %s94 = sphi 0, %s78
    $region4: #{tpu_custom_call.1} parent=1 // loop_header_branch
      %16 = sbr.rel (%p14) target = $region8
    $region5: #{tpu_custom_call.1} parent=1 // loop_body
      %s18 = ssub.s32 %s13, 1
      %s19 = ssub.s32 %s13, 2
      %s29 = sadd.s32 1, %s22
      %p30 = scmp.ge.s32.totalorder %s29, 1
      %s31 = scalar_select %p30, 0, %s29
      %s32 = sadd.s32 1, %s21
      %s33 = scalar_select %p30, %s32, %s21
      %p34 = scmp.ge.s32.totalorder %s33, 1
      %s35 = scalar_select %p34, 0, %s33
      %s36 = sadd.s32 1, %s20
      %s37 = scalar_select %p34, %s36, %s20
      %p38 = scmp.ge.s32.totalorder %s37, 2
      %s39 = scalar_select %p38, 0, %s37
      %s40 = ssub.s32 %s20, %s39
      %s41 = ssub.s32 %s22, %s31
      %s42 = sor.u32 %s40, %s41
      %s43 = ssub.s32 %s21, %s35
      %s44 = sor.u32 %s42, %s43
      %p45 = scmp.eq.s32.totalorder %s44, 0
      %s47 = sadd.s32 %s46, 1
      %s48 = scalar_select %p45, %s46, %s47
      %p51 = pneg %p45
      %p52 = scmp.eq.s32.totalorder %s13, 1
      %p53 = por %p51, %p52
      %p54 = scmp.ne.s32.totalorder %s46, %s49
      %p55 = scmp.eq.s32.totalorder %s13, 0
      %p56 = por %p54, %p55
      %p57 = scmp.ne.s32.totalorder %s46, %s49
      %p58 = scmp.eq.s32.totalorder %s18, 1
      %p59 = por %p57, %p58
      %p60 = scmp.ne.s32.totalorder %s49, %s50
      %p61 = scmp.eq.s32.totalorder %s18, 0
      %p62 = por %p60, %p61
      %p63 = scmp.ne.s32.totalorder %s49, %s50
      %p64 = scmp.eq.s32.totalorder %s19, 1
      %p65 = por %p63, %p64
      %p67 = scmp.ne.s32.totalorder %s50, %s66
      %p68 = scmp.eq.s32.totalorder %s19, 0
      %p69 = por %p67, %p68
      %s70 = ssub.s32 %s20, %s39
      %s71 = ssub.s32 %s21, %s35
      %s72 = sor.u32 %s70, %s71
      %p73 = scmp.eq.s32.totalorder %s72, 0
      %s75 = sadd.s32 %s74, 1
      %s76 = scalar_select %p73, %s74, %s75
      %p79 = pneg %p73
      %p80 = scmp.eq.s32.totalorder %s13, 1
      %p81 = por %p79, %p80
      %p82 = scmp.ne.s32.totalorder %s74, %s77
      %p83 = scmp.eq.s32.totalorder %s13, 0
      %p84 = por %p82, %p83
      %p85 = scmp.ne.s32.totalorder %s74, %s77
      %p86 = scmp.eq.s32.totalorder %s18, 1
      %p87 = por %p85, %p86
      %p88 = scmp.ne.s32.totalorder %s77, %s78
      %p89 = scmp.eq.s32.totalorder %s18, 0
      %p90 = por %p88, %p89
      %p91 = scmp.ne.s32.totalorder %s77, %s78
      %p92 = scmp.eq.s32.totalorder %s19, 1
      %p93 = por %p91, %p92
      %p95 = scmp.ne.s32.totalorder %s78, %s94
      %p96 = scmp.eq.s32.totalorder %s19, 0
      %p97 = por %p95, %p96
      %p98 = scmp.le.s32.totalorder 1, %s13
      %p99 = scmp.lt.s32.totalorder %s13, 3
      %p100 = pnand %p98, %p99
      %p101 = pneg %p100
      // Predicated region
      $region9: #{tpu_custom_call.1} parent=5 // pred_check
        _
      $region10: #{tpu_custom_call.1} parent=5 // pred_check_branch
        %103 = sbr.rel (%p100) target = $region12
      $region11: #{tpu_custom_call.1} parent=5 // pred_region
        %s104 = ssub.s32 %s13, 1
      $region12: #{tpu_custom_call.1} parent=5 // pred_fallthru
        _
      %p105 = scmp.lt.s32.totalorder %s13, 2
      // Predicated region
      $region13: #{tpu_custom_call.1} parent=5 // pred_check
        %p106 = pneg %p105
      $region14: #{tpu_custom_call.1} parent=5 // pred_check_branch
        %108 = sbr.rel (%p106) target = $region16
      $region15: #{tpu_custom_call.1} parent=5 // pred_region
        // Predicated region
        $region17: #{tpu_custom_call.1} parent=15 // pred_check
          %p109 = pneg %p56
        $region18: #{tpu_custom_call.1} parent=15 // pred_check_branch
          %111 = sbr.rel (%p109) target = $region20
        $region19: #{tpu_custom_call.1} parent=15 // pred_region
          %s112 = sand.u32 %s46, 1
          %s113 = scalar_lea.sflag [#allocation3], %s112
          %s114 = sand.u32 %s46, 1
          %s115 = smul.addr %s114, 64
          %s116 = scalar_lea.vmem [#allocation2], %s115
          %s117 = smul.u32 2, %s22
          %s118 = smul.u32 4, %s21
          %s120 = ssub.s32 1024, 1024
          %121 = vsyncadd %s113, %s120
          %s122 = smul.addr %s117, 4
          %s123 = sadd.s32 %s118, %s122
          %s124 = smul.addr %s20, 8
          %s125 = sadd.s32 %s123, %s124
          %s126 = smul.addr %s125, 128
          %s127 = scalar_lea.hbm %s0, %s126
          %s128 = sshll.u32 %s116, 4
          %s129 = int_to_ptr.vmem [resolvable:$true] %s128
          %134 = dma.hbm_to_vmem [thread:$0]  %s127, 1024, %s129, %s113, 512, 512, 32
        $region20: #{tpu_custom_call.1} parent=15 // pred_fallthru
          _
      $region16: #{tpu_custom_call.1} parent=5 // pred_fallthru
        _
      %p135 = scmp.le.s32.totalorder 1, %s13
      %p136 = scmp.lt.s32.totalorder %s13, 3
      %p137 = pnand %p135, %p136
      %p138 = pneg %p137
      // Predicated region
      $region21: #{tpu_custom_call.1} parent=5 // pred_check
        _
      $region22: #{tpu_custom_call.1} parent=5 // pred_check_branch
        %140 = sbr.rel (%p137) target = $region24
      $region23: #{tpu_custom_call.1} parent=5 // pred_region
        %s141 = ssub.s32 %s13, 1
        %s142 = sand.u32 %s49, 1
        %s143 = scalar_lea.sflag [#allocation3], %s142
        %s144 = sand.u32 %s49, 1
        %s145 = smul.addr %s144, 64
        %s146 = scalar_lea.vmem [#allocation2], %s145
        // Predicated region
        $region25: #{tpu_custom_call.1} parent=23 // pred_check
          %p147 = pneg %p62
        $region26: #{tpu_custom_call.1} parent=23 // pred_check_branch
          %149 = sbr.rel (%p147) target = $region28
        $region27: #{tpu_custom_call.1} parent=23 // pred_region
          %150 = dma.done %s143, 1024
        $region28: #{tpu_custom_call.1} parent=23 // pred_fallthru
          _
        %s151 = sand.u32 %s49, 1
        %s152 = scalar_lea.sflag [#allocation3], %s151
        %s153 = sand.u32 %s49, 1
        %s154 = smul.addr %s153, 64
        %s155 = scalar_lea.vmem [#allocation2], %s154
        %p156 = pneg %p62
        %p157 = pneg %p59
        %p158 = pneg %p90
        %p159 = pneg %p87
        %s160 = sand.u32 %s77, 1
        %s161 = scalar_lea.sflag [#allocation4], %s160
        %s162 = sand.u32 %s77, 1
        %s163 = smul.addr %s162, 8
        %s164 = scalar_lea.vmem [#allocation5], %s163
        %s165 = smul.u32 2, %s25
        %s166 = smul.u32 4, %s24
        %s167 = smul.u32 4, %s24
        %v168 = vld [vmem:[%s146] sm:$0xff]
        %v169 = vld [vmem:[%s146 + $0x8] sm:$0xff]
        %v170 = vld [vmem:[%s146 + $0x10] sm:$0xff]
        %v171 = vld [vmem:[%s146 + $0x18] sm:$0xff]
        %v172 = vld [vmem:[%s146 + $0x20] sm:$0xff]
        %v173 = vld [vmem:[%s146 + $0x28] sm:$0xff]
        %v174 = vld [vmem:[%s146 + $0x30] sm:$0xff]
        %v175 = vld [vmem:[%s146 + $0x38] sm:$0xff]
        %v176 = vmax.f32 %v168, %v172
        %v177 = vrot.slane %v176, 4
        %v178 = vmax.f32 %v176, %v177
        %v179 = vrot.slane %v178, 2
        %v180 = vmax.f32 %v178, %v179
        %v181 = vrot.slane %v180, 1
        %v182 = vmax.f32 %v180, %v181
        %v183 = vmax.f32 %v169, %v173
        %v184 = vrot.slane %v183, 4
        %v185 = vmax.f32 %v183, %v184
        %v186 = vrot.slane %v185, 2
        %v187 = vmax.f32 %v185, %v186
        %v188 = vrot.slane %v187, 1
        %v189 = vmax.f32 %v187, %v188
        %v190 = vmax.f32 %v170, %v174
        %v191 = vrot.slane %v190, 4
        %v192 = vmax.f32 %v190, %v191
        %v193 = vrot.slane %v192, 2
        %v194 = vmax.f32 %v192, %v193
        %v195 = vrot.slane %v194, 1
        %v196 = vmax.f32 %v194, %v195
        %v197 = vmax.f32 %v171, %v175
        %v198 = vrot.slane %v197, 4
        %v199 = vmax.f32 %v197, %v198
        %v200 = vrot.slane %v199, 2
        %v201 = vmax.f32 %v199, %v200
        %v202 = vrot.slane %v201, 1
        %v203 = vmax.f32 %v201, %v202
        %v204 = vadd.f32 %v168, %v172
        %v205 = vrot.slane %v204, 4
        %v206 = vadd.f32 %v204, %v205
        %v207 = vrot.slane %v206, 2
        %v208 = vadd.f32 %v206, %v207
        %v209 = vrot.slane %v208, 1
        %v210 = vadd.f32 %v208, %v209
        %v211 = vadd.f32 %v169, %v173
        %v212 = vrot.slane %v211, 4
        %v213 = vadd.f32 %v211, %v212
        %v214 = vrot.slane %v213, 2
        %v215 = vadd.f32 %v213, %v214
        %v216 = vrot.slane %v215, 1
        %v217 = vadd.f32 %v215, %v216
        %v218 = vadd.f32 %v170, %v174
        %v219 = vrot.slane %v218, 4
        %v220 = vadd.f32 %v218, %v219
        %v221 = vrot.slane %v220, 2
        %v222 = vadd.f32 %v220, %v221
        %v223 = vrot.slane %v222, 1
        %v224 = vadd.f32 %v222, %v223
        %v225 = vadd.f32 %v171, %v175
        %v226 = vrot.slane %v225, 4
        %v227 = vadd.f32 %v225, %v226
        %v228 = vrot.slane %v227, 2
        %v229 = vadd.f32 %v227, %v228
        %v230 = vrot.slane %v229, 1
        %v231 = vadd.f32 %v229, %v230
        %p232 = scmp.eq.s32.totalorder %s25, 0
        // Predicated region
        $region29: #{tpu_custom_call.1} parent=23 // pred_check
          %p233 = pneg %p232
        $region30: #{tpu_custom_call.1} parent=23 // pred_check_branch
          %235 = sbr.rel (%p233) target = $region32
        $region31: #{tpu_custom_call.1} parent=23 // pred_region
          %v240 = vcombine.low %v182, %v189
          %v241 = vcombine.low %v196, %v203
          %v243 = vunpack.c.l.s4 1966171168
          %v244 = vunpack.c.0.s8 %v243
          %v245 = vlaneseq
          %v246 = vshrl.u32 %v245, 7
          %v247 = vsub.s32 %v244, %v246
          %v248 = vrot.slane %v240, %v247
          %v250 = vunpack.c.l.s4 1966171168
          %v251 = vunpack.c.0.s8 %v250
          %v252 = vlaneseq
          %v253 = vshrl.u32 %v252, 7
          %v254 = vsub.s32 %v251, %v253
          %v255 = vrot.slane %v241, %v254
          %v256 = vcombine.low %v248, %v255
          %v258 = vunpack.c.l.s4 1966171168
          %v259 = vunpack.c.0.s8 %v258
          %v260 = vlaneseq
          %v261 = vshrl.u32 %v260, 7
          %v262 = vsub.s32 %v259, %v261
          %v263 = vrot.slane %v256, %v262
          %v265 = vlaneseq
          %vm266 = vcmp.ge.s32.totalorder %v265, 0
          %vm267 = vcmp.lt.s32.totalorder %v265, 512
          %vm268 = vmand %vm266, %vm267
          %269 = vst.msk [vmem:[%s164] ss:$2 sm:$0xf] %vm268, %v263
          %v274 = vcombine.low %v210, %v217
          %v275 = vcombine.low %v224, %v231
          %v277 = vunpack.c.l.s4 1966171168
          %v278 = vunpack.c.0.s8 %v277
          %v279 = vlaneseq
          %v280 = vshrl.u32 %v279, 7
          %v281 = vsub.s32 %v278, %v280
          %v282 = vrot.slane %v274, %v281
          %v284 = vunpack.c.l.s4 1966171168
          %v285 = vunpack.c.0.s8 %v284
          %v286 = vlaneseq
          %v287 = vshrl.u32 %v286, 7
          %v288 = vsub.s32 %v285, %v287
          %v289 = vrot.slane %v275, %v288
          %v290 = vcombine.low %v282, %v289
          %v292 = vunpack.c.l.s4 1966171168
          %v293 = vunpack.c.0.s8 %v292
          %v294 = vlaneseq
          %v295 = vshrl.u32 %v294, 7
          %v296 = vsub.s32 %v293, %v295
          %v297 = vrot.slane %v290, %v296
          %s299 = scalar_lea.vmem %s164, 1 [#allocation5]
          %300 = vst.msk [vmem:[%s299] ss:$2 sm:$0xf] %vm268, %v297
        $region32: #{tpu_custom_call.1} parent=23 // pred_fallthru
          _
        %p301 = scmp.gt.s32.totalorder %s25, 0
        // Predicated region
        $region33: #{tpu_custom_call.1} parent=23 // pred_check
          %p302 = pneg %p301
        $region34: #{tpu_custom_call.1} parent=23 // pred_check_branch
          %304 = sbr.rel (%p302) target = $region36
        $region35: #{tpu_custom_call.1} parent=23 // pred_region
          %v305 = vld [vmem:[%s164] ss:$2 sm:$0xf]
          %v310 = vcombine.low %v182, %v189
          %v311 = vcombine.low %v196, %v203
          %v313 = vunpack.c.l.s4 1966171168
          %v314 = vunpack.c.0.s8 %v313
          %v315 = vlaneseq
          %v316 = vshrl.u32 %v315, 7
          %v317 = vsub.s32 %v314, %v316
          %v318 = vrot.slane %v310, %v317
          %v320 = vunpack.c.l.s4 1966171168
          %v321 = vunpack.c.0.s8 %v320
          %v322 = vlaneseq
          %v323 = vshrl.u32 %v322, 7
          %v324 = vsub.s32 %v321, %v323
          %v325 = vrot.slane %v311, %v324
          %v326 = vcombine.low %v318, %v325
          %v328 = vunpack.c.l.s4 1966171168
          %v329 = vunpack.c.0.s8 %v328
          %v330 = vlaneseq
          %v331 = vshrl.u32 %v330, 7
          %v332 = vsub.s32 %v329, %v331
          %v333 = vrot.slane %v326, %v332
          %v335 = vmax.f32 %v305, %v333
          %v336 = vlaneseq
          %vm337 = vcmp.ge.s32.totalorder %v336, 0
          %vm338 = vcmp.lt.s32.totalorder %v336, 512
          %vm339 = vmand %vm337, %vm338
          %340 = vst.msk [vmem:[%s164] ss:$2 sm:$0xf] %vm339, %v335
          %s341 = scalar_lea.vmem %s164, 1 [#allocation5]
          %v342 = vld [vmem:[%s341] ss:$2 sm:$0xf]
          %v347 = vcombine.low %v210, %v217
          %v348 = vcombine.low %v224, %v231
          %v350 = vunpack.c.l.s4 1966171168
          %v351 = vunpack.c.0.s8 %v350
          %v352 = vlaneseq
          %v353 = vshrl.u32 %v352, 7
          %v354 = vsub.s32 %v351, %v353
          %v355 = vrot.slane %v347, %v354
          %v357 = vunpack.c.l.s4 1966171168
          %v358 = vunpack.c.0.s8 %v357
          %v359 = vlaneseq
          %v360 = vshrl.u32 %v359, 7
          %v361 = vsub.s32 %v358, %v360
          %v362 = vrot.slane %v348, %v361
          %v363 = vcombine.low %v355, %v362
          %v365 = vunpack.c.l.s4 1966171168
          %v366 = vunpack.c.0.s8 %v365
          %v367 = vlaneseq
          %v368 = vshrl.u32 %v367, 7
          %v369 = vsub.s32 %v366, %v368
          %v370 = vrot.slane %v363, %v369
          %v372 = vadd.f32 %v342, %v370
          %373 = vst.msk [vmem:[%s341] ss:$2 sm:$0xf] %vm339, %v372
        $region36: #{tpu_custom_call.1} parent=23 // pred_fallthru
          _
        // Predicated region
        $region37: #{tpu_custom_call.1} parent=23 // pred_check
          %p374 = pneg %p232
        $region38: #{tpu_custom_call.1} parent=23 // pred_check_branch
          %376 = sbr.rel (%p374) target = $region40
        $region39: #{tpu_custom_call.1} parent=23 // pred_region
          %s377 = scalar_lea.vmem %s164, 1 [#allocation5]
          %v378 = vld [vmem:[%s377] ss:$2 sm:$0xf]
          %v379 = vmul.f32 %v378, 0.0625
          %v380 = vlaneseq
          %vm381 = vcmp.ge.s32.totalorder %v380, 0
          %vm382 = vcmp.lt.s32.totalorder %v380, 512
          %vm383 = vmand %vm381, %vm382
          %384 = vst.msk [vmem:[%s377] ss:$2 sm:$0xf] %vm383, %v379
        $region40: #{tpu_custom_call.1} parent=23 // pred_fallthru
          _
        %s385 = sand.u32 %s77, 1
        %s386 = scalar_lea.sflag [#allocation4], %s385
        %s387 = sand.u32 %s77, 1
        %s388 = smul.addr %s387, 8
        %s389 = scalar_lea.vmem [#allocation5], %s388
        // Predicated region
        $region41: #{tpu_custom_call.1} parent=23 // pred_check
          %p390 = pneg %p87
        $region42: #{tpu_custom_call.1} parent=23 // pred_check_branch
          %392 = sbr.rel (%p390) target = $region44
        $region43: #{tpu_custom_call.1} parent=23 // pred_region
          %s393 = smul.u32 4, %s24
          %s395 = ssub.s32 128, 128
          %396 = vsyncadd %s386, %s395
          %s397 = smul.addr %s23, 4
          %s398 = sadd.s32 %s393, %s397
          %s399 = smul.addr %s398, 32
          %s400 = scalar_lea.hbm %s1, %s399
          %s402 = sshll.u32 %s389, 4
          %s403 = int_to_ptr.vmem [resolvable:$true] %s402
          %405 = dma.vmem_to_hbm [thread:$0]  %s403, 128, %s400, %s386
        $region44: #{tpu_custom_call.1} parent=23 // pred_fallthru
          _
      $region24: #{tpu_custom_call.1} parent=5 // pred_fallthru
        _
      %p406 = scmp.le.s32.totalorder 2, %s13
      // Predicated region
      $region45: #{tpu_custom_call.1} parent=5 // pred_check
        %p407 = pneg %p406
      $region46: #{tpu_custom_call.1} parent=5 // pred_check_branch
        %409 = sbr.rel (%p407) target = $region48
      $region47: #{tpu_custom_call.1} parent=5 // pred_region
        %s410 = ssub.s32 %s13, 2
        // Predicated region
        $region49: #{tpu_custom_call.1} parent=47 // pred_check
          %p411 = pneg %p93
        $region50: #{tpu_custom_call.1} parent=47 // pred_check_branch
          %413 = sbr.rel (%p411) target = $region52
        $region51: #{tpu_custom_call.1} parent=47 // pred_region
          %s414 = sand.u32 %s78, 1
          %s415 = scalar_lea.sflag [#allocation4], %s414
          %s416 = sand.u32 %s78, 1
          %s417 = smul.addr %s416, 8
          %s418 = scalar_lea.vmem [#allocation5], %s417
          %419 = dma.done %s415, 128
        $region52: #{tpu_custom_call.1} parent=47 // pred_fallthru
          _
      $region48: #{tpu_custom_call.1} parent=5 // pred_fallthru
        _
    $region6: #{tpu_custom_call.1} parent=1 // loop_footer
      %s17 = sadd.s32 1, %s13
    $region7: #{tpu_custom_call.1} parent=1 // loop_footer_branch
      %12 = sbr.rel target = $region3
    $region8: #{tpu_custom_call.1} parent=1 // loop_exit
      _
    %420 = vsyncpa [#allocation3], 1
    %s421 = scalar_lea.sflag [#allocation3], 1
    %422 = vsyncpa %s421, 1
    %423 = vsyncpa [#allocation4], 1
    %s424 = scalar_lea.sflag [#allocation4], 1
    %425 = vsyncpa %s424, 1

</llo_original>
